<compile_context>
chip_gen: v6e
topology: v6e:2x2x1
jax: 0.10.0
libtpu: 0.0.40
codegen_flags: <defaults>
</compile_context>

<pallas_src>
import jax
import jax.numpy as jnp
from jax.experimental import pallas as pl
from jax.experimental.pallas import tpu as pltpu


def _mlp_kernel(x_ref, *refs):
    """Fused MLP forward for one batch tile.

    refs = (w0, b0, w1, b1, ..., wL, bL, out_ref)
    Hidden layers: h = relu(h @ w + b); final layer: no activation.
    Matmuls run in bf16 on the MXU with f32 accumulation; bias add / ReLU in f32.
    """
    out_ref = refs[-1]
    param_refs = refs[:-1]
    n_layers = len(param_refs) // 2

    h = x_ref[...]  # bf16 (tb, in_dim)
    for i in range(n_layers):
        w = param_refs[2 * i][...]        # bf16 (fan_in, fan_out)
        b = param_refs[2 * i + 1][...]    # f32  (1, fan_out)
        acc = jnp.dot(h, w, preferred_element_type=jnp.float32) + b
        if i < n_layers - 1:
            acc = jnp.maximum(acc, 0.0)   # ReLU (non_linearity=F.relu)
            h = acc.astype(jnp.bfloat16)  # back to bf16 for the next MXU pass
        else:
            h = acc                       # final layer stays f32
    out_ref[...] = h.astype(out_ref.dtype)


def _pick_batch_tile(B):
    """Largest tile <=512 that divides B, is a multiple of 8, and leaves >=2 grid steps."""
    for tb in (512, 256, 128, 64, 32, 16, 8):
        if B % tb == 0 and B // tb >= 2:
            return tb
    return B  # tiny batch: single grid step, full-extent block


def _round_up(x, m):
    return ((x + m - 1) // m) * m


def vanilla_nn_forward(x, params, *, batch_tile=None, compute_dtype=jnp.bfloat16):
    """Run the fused MLP Pallas kernel.

    :param x: (batch, in_dim) float32 array.
    :param params: list of (w, b) with w: (fan_in, fan_out) f32, b: (1, fan_out) f32.
    :param batch_tile: batch tile size (default: auto, multiple of 8, >=2 grid steps).
    """
    B, in_dim = x.shape
    out_dim = params[-1][0].shape[1]
    n_layers = len(params)

    tb = _pick_batch_tile(B) if batch_tile is None else batch_tile
    assert B % tb == 0, "batch must be divisible by batch_tile"
    assert tb == B or tb % 8 == 0, "batch_tile must be a multiple of 8 (f32 sublane)"

    # Lane-dense output slab: pad the final fan_out up to a multiple of 128.
    out_pad = _round_up(out_dim, 128)

    x_lp = x.astype(compute_dtype)

    in_specs = [pl.BlockSpec((tb, in_dim), lambda i: (i, 0))]
    flat_params = []
    for li, (w, b) in enumerate(params):
        w_lp = w.astype(compute_dtype)
        b_f32 = b.astype(jnp.float32)
        if li == n_layers - 1 and out_pad != out_dim:
            w_lp = jnp.pad(w_lp, ((0, 0), (0, out_pad - out_dim)))
            b_f32 = jnp.pad(b_f32, ((0, 0), (0, out_pad - out_dim)))
        # Constant index_map -> no need to double-buffer: keep a single resident copy.
        in_specs.append(
            pl.BlockSpec(w_lp.shape, lambda i: (0, 0), pipeline_mode=pl.Buffered(1)))
        in_specs.append(
            pl.BlockSpec(b_f32.shape, lambda i: (0, 0), pipeline_mode=pl.Buffered(1)))
        flat_params.extend([w_lp, b_f32])

    out_specs = pl.BlockSpec((tb, out_pad), lambda i: (i, 0))

    # --- VMEM budget (explicit scoped limit) and scheduler cost estimate ---
    act_itemsize = jnp.dtype(compute_dtype).itemsize
    param_bytes = sum(int(p.size) * p.dtype.itemsize for p in flat_params)
    widest = max([in_dim, out_pad] + [int(w.shape[1]) for (w, _) in params])
    vmem_need = (
        2 * tb * in_dim * act_itemsize   # double-buffered x tile
        + 2 * tb * out_pad * 4           # double-buffered out tile (f32)
        + param_bytes                    # single-buffered weights/biases
        + 4 * tb * widest * 4            # activation temporaries headroom (f32)
    )
    vmem_limit = min(int(vmem_need * 1.5) + (4 << 20), 64 << 20)  # stay under v7x 64 MiB

    flops = 2 * B * sum(int(w.shape[0]) * int(w.shape[1]) for (w, _) in params)
    bytes_accessed = int(x_lp.size) * act_itemsize + param_bytes + B * out_pad * 4

    # TODO(synk): for very wide layers (>=2048 f32 / >=4096 bf16 on v7x's 64 MiB VMEM),
    # add an output-N tiling grid axis for the large matmuls instead of keeping every
    # weight fully resident.
    fn = pl.pallas_call(
        _mlp_kernel,
        out_shape=jax.ShapeDtypeStruct((B, out_pad), jnp.float32),
        grid_spec=pltpu.PrefetchScalarGridSpec(
            num_scalar_prefetch=0,
            grid=(B // tb,),
            in_specs=in_specs,
            out_specs=out_specs,
        ),
        compiler_params=pltpu.CompilerParams(
            dimension_semantics=("parallel",),
            vmem_limit_bytes=vmem_limit,
        ),
        cost_estimate=pl.CostEstimate(
            flops=flops, transcendentals=0, bytes_accessed=bytes_accessed),
    )
    out = fn(x_lp, *flat_params)
    return out[:, :out_dim] if out_pad != out_dim else out


def init_params(key, in_dim, out_dim, hidden_dims):
    """Deterministic init mimicking nn.Linear default (uniform +-1/sqrt(fan_in))."""
    dims = [in_dim] + list(hidden_dims) + [out_dim]
    params = []
    for i in range(len(dims) - 1):
        fan_in, fan_out = dims[i], dims[i + 1]
        key, kw, kb = jax.random.split(key, 3)
        bound = 1.0 / jnp.sqrt(jnp.float32(fan_in))
        w = jax.random.uniform(kw, (fan_in, fan_out), jnp.float32, -bound, bound)
        b = jax.random.uniform(kb, (1, fan_out), jnp.float32, -bound, bound)
        params.append((w, b))
    return params


def reference_forward_f32(x, params):
    """Pure-JAX f32 reference matching VanillaNN.forward semantics."""
    h = x
    for i, (w, b) in enumerate(params):
        h = h @ w + b
        if i < len(params) - 1:
            h = jnp.maximum(h, 0.0)
    return h


def reference_forward_bf16(x, params):
    """Pure-JAX reference with the same bf16-input / f32-accumulate precision."""
    h = x.astype(jnp.bfloat16)
    for i, (w, b) in enumerate(params):
        acc = jnp.dot(h, w.astype(jnp.bfloat16),
                      preferred_element_type=jnp.float32) + b.astype(jnp.float32)
        if i < len(params) - 1:
            acc = jnp.maximum(acc, 0.0)
            h = acc.astype(jnp.bfloat16)
        else:
            h = acc
    return h


if __name__ == "__main__":
    # Small shapes consistent with forward(): x is (batch_size, in_dim).
    # Batch of 256 -> auto tile 128 -> 2 grid steps (exercises pipelining / megacore).
    batch, in_dim, out_dim = 256, 16, 4
    hidden_dims = [128, 128]

    key = jax.random.PRNGKey(0)
    key, kx = jax.random.split(key)
    x = jax.random.normal(kx, (batch, in_dim), jnp.float32)

    params = init_params(key, in_dim, out_dim, hidden_dims)

    out = vanilla_nn_forward(x, params)
    out = jax.block_until_ready(out)
    assert out.shape == (batch, out_dim)

    # Matched-precision reference (bf16 inputs, f32 accumulation).
    ref_lp = reference_forward_bf16(x, params)
    assert jnp.allclose(out, ref_lp, atol=2e-3, rtol=2e-3), "mismatch vs bf16 reference"

    # Loose check vs full-f32 reference (bf16 matmul rounding only).
    ref_f32 = reference_forward_f32(x, params)
    assert jnp.allclose(out, ref_f32, atol=5e-2, rtol=5e-2), "mismatch vs f32 reference"

    # TODO(synk): `predict()` (torch.split + per-chunk mean over variable-length chunks)
    # is host-side glue outside the hot path; it is left in plain JAX.

    print("KERNEL_OK")
</pallas_src>

<mosaic_0001>
module attributes {stable_mosaic.version = 11 : i64} {
  func.func @_mlp_kernel(%arg0: i32, %arg1: memref<128x16xbf16, #tpu.memory_space<vmem>>, %arg2: memref<16x128xbf16, #tpu.memory_space<vmem>>, %arg3: memref<1x128xf32, #tpu.memory_space<vmem>>, %arg4: memref<128x128xbf16, #tpu.memory_space<vmem>>, %arg5: memref<1x128xf32, #tpu.memory_space<vmem>>, %arg6: memref<128x128xbf16, #tpu.memory_space<vmem>>, %arg7: memref<1x128xf32, #tpu.memory_space<vmem>>, %arg8: memref<128x128xf32, #tpu.memory_space<vmem>>) attributes {dimension_semantics = [#tpu.dimension_semantics<parallel>], iteration_bounds = array<i64: 2>, scalar_prefetch = 0 : i64, scratch_operands = 0 : i64, tpu.core_type = #tpu.core_type<tc>, window_params = [{transform_indices = @transform_0, window_bounds = array<i64: 128, 16>}, {pipeline_mode = #tpu.pipeline_mode<synchronous>, transform_indices = @transform_1, window_bounds = array<i64: 16, 128>}, {pipeline_mode = #tpu.pipeline_mode<synchronous>, transform_indices = @transform_2, window_bounds = array<i64: 1, 128>}, {pipeline_mode = #tpu.pipeline_mode<synchronous>, transform_indices = @transform_3, window_bounds = array<i64: 128, 128>}, {pipeline_mode = #tpu.pipeline_mode<synchronous>, transform_indices = @transform_4, window_bounds = array<i64: 1, 128>}, {pipeline_mode = #tpu.pipeline_mode<synchronous>, transform_indices = @transform_5, window_bounds = array<i64: 128, 128>}, {pipeline_mode = #tpu.pipeline_mode<synchronous>, transform_indices = @transform_6, window_bounds = array<i64: 1, 128>}, {transform_indices = @transform_7, window_bounds = array<i64: 128, 128>}]} {
    %c0 = arith.constant 0 : index
    %c0_0 = arith.constant 0 : index
    %0 = vector.load %arg1[%c0, %c0_0] : memref<128x16xbf16, #tpu.memory_space<vmem>>, vector<128x16xbf16>
    %c0_1 = arith.constant 0 : index
    %c0_2 = arith.constant 0 : index
    %1 = vector.load %arg2[%c0_1, %c0_2] : memref<16x128xbf16, #tpu.memory_space<vmem>>, vector<16x128xbf16>
    %c0_3 = arith.constant 0 : index
    %c0_4 = arith.constant 0 : index
    %2 = vector.load %arg3[%c0_3, %c0_4] : memref<1x128xf32, #tpu.memory_space<vmem>>, vector<1x128xf32>
    %cst = arith.constant dense<0.000000e+00> : vector<128x128xf32>
    %3 = tpu.matmul %0, %1, %cst {dimension_numbers = #tpu.dot_dimension_numbers<[1], [0], [0], [1], [0, 0, 1, 1], [], []>} : vector<128x16xbf16>, vector<16x128xbf16>, vector<128x128xf32> -> vector<128x128xf32>
    %4 = vector.broadcast %2 : vector<1x128xf32> to vector<128x128xf32>
    %5 = arith.addf %3, %4 : vector<128x128xf32>
    %cst_5 = arith.constant 0.000000e+00 : f32
    %6 = vector.broadcast %cst_5 : f32 to vector<128x128xf32>
    %7 = arith.maximumf %5, %6 : vector<128x128xf32>
    %8 = arith.truncf %7 : vector<128x128xf32> to vector<128x128xbf16>
    %c0_6 = arith.constant 0 : index
    %c0_7 = arith.constant 0 : index
    %9 = vector.load %arg4[%c0_6, %c0_7] : memref<128x128xbf16, #tpu.memory_space<vmem>>, vector<128x128xbf16>
    %c0_8 = arith.constant 0 : index
    %c0_9 = arith.constant 0 : index
    %10 = vector.load %arg5[%c0_8, %c0_9] : memref<1x128xf32, #tpu.memory_space<vmem>>, vector<1x128xf32>
    %cst_10 = arith.constant dense<0.000000e+00> : vector<128x128xf32>
    %11 = tpu.matmul %8, %9, %cst_10 {dimension_numbers = #tpu.dot_dimension_numbers<[1], [0], [0], [1], [0, 0, 1, 1], [], []>} : vector<128x128xbf16>, vector<128x128xbf16>, vector<128x128xf32> -> vector<128x128xf32>
    %12 = vector.broadcast %10 : vector<1x128xf32> to vector<128x128xf32>
    %13 = arith.addf %11, %12 : vector<128x128xf32>
    %cst_11 = arith.constant 0.000000e+00 : f32
    %14 = vector.broadcast %cst_11 : f32 to vector<128x128xf32>
    %15 = arith.maximumf %13, %14 : vector<128x128xf32>
    %16 = arith.truncf %15 : vector<128x128xf32> to vector<128x128xbf16>
    %c0_12 = arith.constant 0 : index
    %c0_13 = arith.constant 0 : index
    %17 = vector.load %arg6[%c0_12, %c0_13] : memref<128x128xbf16, #tpu.memory_space<vmem>>, vector<128x128xbf16>
    %c0_14 = arith.constant 0 : index
    %c0_15 = arith.constant 0 : index
    %18 = vector.load %arg7[%c0_14, %c0_15] : memref<1x128xf32, #tpu.memory_space<vmem>>, vector<1x128xf32>
    %cst_16 = arith.constant dense<0.000000e+00> : vector<128x128xf32>
    %19 = tpu.matmul %16, %17, %cst_16 {dimension_numbers = #tpu.dot_dimension_numbers<[1], [0], [0], [1], [0, 0, 1, 1], [], []>} : vector<128x128xbf16>, vector<128x128xbf16>, vector<128x128xf32> -> vector<128x128xf32>
    %20 = vector.broadcast %18 : vector<1x128xf32> to vector<128x128xf32>
    %21 = arith.addf %19, %20 : vector<128x128xf32>
    %c0_17 = arith.constant 0 : index
    %c0_18 = arith.constant 0 : index
    %22 = vector.load %arg8[%c0_17, %c0_18] : memref<128x128xf32, #tpu.memory_space<vmem>>, vector<128x128xf32>
    tpu.vector_store %arg8[%c0_17, %c0_18], %21 {strides = array<i32>} : memref<128x128xf32, #tpu.memory_space<vmem>>, vector<128x128xf32>,
    return
  }
  func.func @transform_0(%arg0: i32) -> (i32, i32) {
    %c0_i32 = arith.constant 0 : i32
    %c0_i32_0 = arith.constant 0 : i32
    return %arg0, %c0_i32 : i32, i32
  }
  func.func @transform_1(%arg0: i32) -> (i32, i32) {
    %c0_i32 = arith.constant 0 : i32
    %c0_i32_0 = arith.constant 0 : i32
    %c0_i32_1 = arith.constant 0 : i32
    return %c0_i32, %c0_i32_0 : i32, i32
  }
  func.func @transform_2(%arg0: i32) -> (i32, i32) {
    %c0_i32 = arith.constant 0 : i32
    %c0_i32_0 = arith.constant 0 : i32
    %c0_i32_1 = arith.constant 0 : i32
    return %c0_i32, %c0_i32_0 : i32, i32
  }
  func.func @transform_3(%arg0: i32) -> (i32, i32) {
    %c0_i32 = arith.constant 0 : i32
    %c0_i32_0 = arith.constant 0 : i32
    %c0_i32_1 = arith.constant 0 : i32
    return %c0_i32, %c0_i32_0 : i32, i32
  }
  func.func @transform_4(%arg0: i32) -> (i32, i32) {
    %c0_i32 = arith.constant 0 : i32
    %c0_i32_0 = arith.constant 0 : i32
    %c0_i32_1 = arith.constant 0 : i32
    return %c0_i32, %c0_i32_0 : i32, i32
  }
  func.func @transform_5(%arg0: i32) -> (i32, i32) {
    %c0_i32 = arith.constant 0 : i32
    %c0_i32_0 = arith.constant 0 : i32
    %c0_i32_1 = arith.constant 0 : i32
    return %c0_i32, %c0_i32_0 : i32, i32
  }
  func.func @transform_6(%arg0: i32) -> (i32, i32) {
    %c0_i32 = arith.constant 0 : i32
    %c0_i32_0 = arith.constant 0 : i32
    %c0_i32_1 = arith.constant 0 : i32
    return %c0_i32, %c0_i32_0 : i32, i32
  }
  func.func @transform_7(%arg0: i32) -> (i32, i32) {
    %c0_i32 = arith.constant 0 : i32
    %c0_i32_0 = arith.constant 0 : i32
    return %arg0, %c0_i32 : i32, i32
  }
}

</mosaic_0001>

<llo_original>
// kernel: tpu_custom_call.1
$region0: #{tpu_custom_call.1}
  #allocation0 [shape = 'u32[]', space=smem, size = 0x4, offset = 0x4, fixed_abs, tag = 'smem constant byte address 0x4 - core index']
  #allocation1 [shape = 'u32[144,128]{1,0:T(1,128)}', space=vmem, size = 0x12000, scoped, tag = 'internal scratch']
  %s0 = inlined_call_operand.vmem [shape: bf16[256,16], index: 0, kind: input, shape index: {}]
  %s1 = inlined_call_operand.vmem [shape: bf16[16,128], index: 1, kind: input, shape index: {}]
  %s2 = inlined_call_operand.vmem [shape: f32[1,128], index: 2, kind: input, shape index: {}]
  %s3 = inlined_call_operand.vmem [shape: bf16[128,128], index: 3, kind: input, shape index: {}]
  %s4 = inlined_call_operand.vmem [shape: f32[1,128], index: 4, kind: input, shape index: {}]
  %s5 = inlined_call_operand.vmem [shape: bf16[128,128], index: 5, kind: input, shape index: {}]
  %s6 = inlined_call_operand.vmem [shape: f32[1,128], index: 6, kind: input, shape index: {}]
  %s7 = inlined_call_operand.hbm [shape: f32[256,128], index: 7, kind: output, shape index: {}]
  %s8 = sld [smem:[#allocation0]]
  $region61: #{tpu_custom_call.1} parent=0
    _
  %s10 = ssub.s32 1, %s8
  %s11 = scalar_select 0, %s10, %s8
  $region1: #{tpu_custom_call.1} parent=0
    #allocation2 [shape = 'u8[131072]{0}', space=vmem, size = 0x20000, scoped, tag = 'output window, operand 0']
    #allocation3 [shape = 's32[2]{0}', space=sflag, size = 0x8, scoped, tag = 'scoped memory for tpu_custom_call.1']
    %12 = vsyncpa [#allocation3], 0
    %s13 = scalar_lea.sflag [#allocation3], 1
    %14 = vsyncpa %s13, 0
    loop: start=0, step=1, limit=4
    $region2: #{tpu_custom_call.1} parent=1 // loop_pre_header
      _
    $region3: #{tpu_custom_call.1} parent=1 // loop_header
      %s16 = sphi 0, %s20
      %p17 = scmp.ge.s32.totalorder %s16, 4
      %s26 = sphi 0, %s28
      %s29 = sphi 0, %s26
      %s30 = sphi 0, %s29
      %s46 = sphi 0, %s30
      %s50 = sphi 0, %s50
      %s52 = sphi 0, %s50
      %s53 = sphi 0, %s52
      %s67 = sphi 0, %s53
      %s71 = sphi 0, %s71
      %s73 = sphi 0, %s71
      %s74 = sphi 0, %s73
      %s88 = sphi 0, %s74
      %s92 = sphi 0, %s92
      %s94 = sphi 0, %s92
      %s95 = sphi 0, %s94
      %s109 = sphi 0, %s95
      %s113 = sphi 0, %s113
      %s115 = sphi 0, %s113
      %s116 = sphi 0, %s115
      %s130 = sphi 0, %s116
      %s134 = sphi 0, %s134
      %s136 = sphi 0, %s134
      %s137 = sphi 0, %s136
      %s151 = sphi 0, %s137
      %s155 = sphi 0, %s155
      %s157 = sphi 0, %s155
      %s158 = sphi 0, %s157
      %s172 = sphi 0, %s158
      %s178 = sphi 0, %s180
      %s181 = sphi 0, %s178
      %s182 = sphi 0, %s181
      %s198 = sphi 0, %s182
    $region4: #{tpu_custom_call.1} parent=1 // loop_header_branch
      %19 = sbr.rel (%p17) target = $region8
    $region5: #{tpu_custom_call.1} parent=1 // loop_body
      %s21 = ssub.s32 %s16, 1
      %s22 = ssub.s32 %s16, 2
      %s23 = sadd.s32 %s16, 1
      %s24 = ssub.s32 %s16, %s23
      %p25 = scmp.eq.s32.totalorder %s24, 0
      %s27 = sadd.s32 %s26, 1
      %s28 = scalar_select %p25, %s26, %s27
      %p31 = pneg %p25
      %p32 = scmp.eq.s32.totalorder %s16, 1
      %p33 = por %p31, %p32
      %p34 = scmp.ne.s32.totalorder %s26, %s29
      %p35 = scmp.eq.s32.totalorder %s16, 0
      %p36 = por %p34, %p35
      %p37 = scmp.ne.s32.totalorder %s26, %s29
      %p38 = scmp.eq.s32.totalorder %s21, 1
      %p39 = por %p37, %p38
      %p40 = scmp.ne.s32.totalorder %s29, %s30
      %p41 = scmp.eq.s32.totalorder %s21, 0
      %p42 = por %p40, %p41
      %p43 = scmp.ne.s32.totalorder %s29, %s30
      %p44 = scmp.eq.s32.totalorder %s22, 1
      %p45 = por %p43, %p44
      %p47 = scmp.ne.s32.totalorder %s30, %s46
      %p48 = scmp.eq.s32.totalorder %s22, 0
      %p49 = por %p47, %p48
      %s51 = sadd.s32 %s50, 1
      %p54 = scmp.eq.s32.totalorder %s16, 1
      %p55 = scmp.ne.s32.totalorder %s50, %s52
      %p56 = scmp.eq.s32.totalorder %s16, 0
      %p57 = por %p55, %p56
      %p58 = scmp.ne.s32.totalorder %s50, %s52
      %p59 = scmp.eq.s32.totalorder %s21, 1
      %p60 = por %p58, %p59
      %p61 = scmp.ne.s32.totalorder %s52, %s53
      %p62 = scmp.eq.s32.totalorder %s21, 0
      %p63 = por %p61, %p62
      %p64 = scmp.ne.s32.totalorder %s52, %s53
      %p65 = scmp.eq.s32.totalorder %s22, 1
      %p66 = por %p64, %p65
      %p68 = scmp.ne.s32.totalorder %s53, %s67
      %p69 = scmp.eq.s32.totalorder %s22, 0
      %p70 = por %p68, %p69
      %s72 = sadd.s32 %s71, 1
      %p75 = scmp.eq.s32.totalorder %s16, 1
      %p76 = scmp.ne.s32.totalorder %s71, %s73
      %p77 = scmp.eq.s32.totalorder %s16, 0
      %p78 = por %p76, %p77
      %p79 = scmp.ne.s32.totalorder %s71, %s73
      %p80 = scmp.eq.s32.totalorder %s21, 1
      %p81 = por %p79, %p80
      %p82 = scmp.ne.s32.totalorder %s73, %s74
      %p83 = scmp.eq.s32.totalorder %s21, 0
      %p84 = por %p82, %p83
      %p85 = scmp.ne.s32.totalorder %s73, %s74
      %p86 = scmp.eq.s32.totalorder %s22, 1
      %p87 = por %p85, %p86
      %p89 = scmp.ne.s32.totalorder %s74, %s88
      %p90 = scmp.eq.s32.totalorder %s22, 0
      %p91 = por %p89, %p90
      %s93 = sadd.s32 %s92, 1
      %p96 = scmp.eq.s32.totalorder %s16, 1
      %p97 = scmp.ne.s32.totalorder %s92, %s94
      %p98 = scmp.eq.s32.totalorder %s16, 0
      %p99 = por %p97, %p98
      %p100 = scmp.ne.s32.totalorder %s92, %s94
      %p101 = scmp.eq.s32.totalorder %s21, 1
      %p102 = por %p100, %p101
      %p103 = scmp.ne.s32.totalorder %s94, %s95
      %p104 = scmp.eq.s32.totalorder %s21, 0
      %p105 = por %p103, %p104
      %p106 = scmp.ne.s32.totalorder %s94, %s95
      %p107 = scmp.eq.s32.totalorder %s22, 1
      %p108 = por %p106, %p107
      %p110 = scmp.ne.s32.totalorder %s95, %s109
      %p111 = scmp.eq.s32.totalorder %s22, 0
      %p112 = por %p110, %p111
      %s114 = sadd.s32 %s113, 1
      %p117 = scmp.eq.s32.totalorder %s16, 1
      %p118 = scmp.ne.s32.totalorder %s113, %s115
      %p119 = scmp.eq.s32.totalorder %s16, 0
      %p120 = por %p118, %p119
      %p121 = scmp.ne.s32.totalorder %s113, %s115
      %p122 = scmp.eq.s32.totalorder %s21, 1
      %p123 = por %p121, %p122
      %p124 = scmp.ne.s32.totalorder %s115, %s116
      %p125 = scmp.eq.s32.totalorder %s21, 0
      %p126 = por %p124, %p125
      %p127 = scmp.ne.s32.totalorder %s115, %s116
      %p128 = scmp.eq.s32.totalorder %s22, 1
      %p129 = por %p127, %p128
      %p131 = scmp.ne.s32.totalorder %s116, %s130
      %p132 = scmp.eq.s32.totalorder %s22, 0
      %p133 = por %p131, %p132
      %s135 = sadd.s32 %s134, 1
      %p138 = scmp.eq.s32.totalorder %s16, 1
      %p139 = scmp.ne.s32.totalorder %s134, %s136
      %p140 = scmp.eq.s32.totalorder %s16, 0
      %p141 = por %p139, %p140
      %p142 = scmp.ne.s32.totalorder %s134, %s136
      %p143 = scmp.eq.s32.totalorder %s21, 1
      %p144 = por %p142, %p143
      %p145 = scmp.ne.s32.totalorder %s136, %s137
      %p146 = scmp.eq.s32.totalorder %s21, 0
      %p147 = por %p145, %p146
      %p148 = scmp.ne.s32.totalorder %s136, %s137
      %p149 = scmp.eq.s32.totalorder %s22, 1
      %p150 = por %p148, %p149
      %p152 = scmp.ne.s32.totalorder %s137, %s151
      %p153 = scmp.eq.s32.totalorder %s22, 0
      %p154 = por %p152, %p153
      %s156 = sadd.s32 %s155, 1
      %p159 = scmp.eq.s32.totalorder %s16, 1
      %p160 = scmp.ne.s32.totalorder %s155, %s157
      %p161 = scmp.eq.s32.totalorder %s16, 0
      %p162 = por %p160, %p161
      %p163 = scmp.ne.s32.totalorder %s155, %s157
      %p164 = scmp.eq.s32.totalorder %s21, 1
      %p165 = por %p163, %p164
      %p166 = scmp.ne.s32.totalorder %s157, %s158
      %p167 = scmp.eq.s32.totalorder %s21, 0
      %p168 = por %p166, %p167
      %p169 = scmp.ne.s32.totalorder %s157, %s158
      %p170 = scmp.eq.s32.totalorder %s22, 1
      %p171 = por %p169, %p170
      %p173 = scmp.ne.s32.totalorder %s158, %s172
      %p174 = scmp.eq.s32.totalorder %s22, 0
      %p175 = por %p173, %p174
      %s176 = ssub.s32 %s16, %s23
      %p177 = scmp.eq.s32.totalorder %s176, 0
      %s179 = sadd.s32 %s178, 1
      %s180 = scalar_select %p177, %s178, %s179
      %p183 = pneg %p177
      %p184 = scmp.eq.s32.totalorder %s16, 1
      %p185 = por %p183, %p184
      %p186 = scmp.ne.s32.totalorder %s178, %s181
      %p187 = scmp.eq.s32.totalorder %s16, 0
      %p188 = por %p186, %p187
      %p189 = scmp.ne.s32.totalorder %s178, %s181
      %p190 = scmp.eq.s32.totalorder %s21, 1
      %p191 = por %p189, %p190
      %p192 = scmp.ne.s32.totalorder %s181, %s182
      %p193 = scmp.eq.s32.totalorder %s21, 0
      %p194 = por %p192, %p193
      %p195 = scmp.ne.s32.totalorder %s181, %s182
      %p196 = scmp.eq.s32.totalorder %s22, 1
      %p197 = por %p195, %p196
      %p199 = scmp.ne.s32.totalorder %s182, %s198
      %p200 = scmp.eq.s32.totalorder %s22, 0
      %p201 = por %p199, %p200
      %p202 = scmp.le.s32.totalorder 1, %s16
      %p203 = scmp.lt.s32.totalorder %s16, 3
      %p204 = pnand %p202, %p203
      %p205 = pneg %p204
      // Predicated region
      $region9: #{tpu_custom_call.1} parent=5 // pred_check
        _
      $region10: #{tpu_custom_call.1} parent=5 // pred_check_branch
        %207 = sbr.rel (%p204) target = $region12
      $region11: #{tpu_custom_call.1} parent=5 // pred_region
        %s208 = ssub.s32 %s16, 1
        // Predicated region
        $region13: #{tpu_custom_call.1} parent=11 // pred_check
          %p209 = pneg %p63
        $region14: #{tpu_custom_call.1} parent=11 // pred_check_branch
          %211 = sbr.rel (%p209) target = $region16
        $region15: #{tpu_custom_call.1} parent=11 // pred_region
          _
        $region16: #{tpu_custom_call.1} parent=11 // pred_fallthru
          _
        // Predicated region
        $region17: #{tpu_custom_call.1} parent=11 // pred_check
          %p212 = pneg %p84
        $region18: #{tpu_custom_call.1} parent=11 // pred_check_branch
          %214 = sbr.rel (%p212) target = $region20
        $region19: #{tpu_custom_call.1} parent=11 // pred_region
          _
        $region20: #{tpu_custom_call.1} parent=11 // pred_fallthru
          _
        // Predicated region
        $region21: #{tpu_custom_call.1} parent=11 // pred_check
          %p215 = pneg %p105
        $region22: #{tpu_custom_call.1} parent=11 // pred_check_branch
          %217 = sbr.rel (%p215) target = $region24
        $region23: #{tpu_custom_call.1} parent=11 // pred_region
          _
        $region24: #{tpu_custom_call.1} parent=11 // pred_fallthru
          _
        // Predicated region
        $region25: #{tpu_custom_call.1} parent=11 // pred_check
          %p218 = pneg %p126
        $region26: #{tpu_custom_call.1} parent=11 // pred_check_branch
          %220 = sbr.rel (%p218) target = $region28
        $region27: #{tpu_custom_call.1} parent=11 // pred_region
          _
        $region28: #{tpu_custom_call.1} parent=11 // pred_fallthru
          _
        // Predicated region
        $region29: #{tpu_custom_call.1} parent=11 // pred_check
          %p221 = pneg %p147
        $region30: #{tpu_custom_call.1} parent=11 // pred_check_branch
          %223 = sbr.rel (%p221) target = $region32
        $region31: #{tpu_custom_call.1} parent=11 // pred_region
          _
        $region32: #{tpu_custom_call.1} parent=11 // pred_fallthru
          _
        // Predicated region
        $region33: #{tpu_custom_call.1} parent=11 // pred_check
          %p224 = pneg %p168
        $region34: #{tpu_custom_call.1} parent=11 // pred_check_branch
          %226 = sbr.rel (%p224) target = $region36
        $region35: #{tpu_custom_call.1} parent=11 // pred_region
          _
        $region36: #{tpu_custom_call.1} parent=11 // pred_fallthru
          _
      $region12: #{tpu_custom_call.1} parent=5 // pred_fallthru
        _
      %p227 = scmp.lt.s32.totalorder %s16, 2
      // Predicated region
      $region37: #{tpu_custom_call.1} parent=5 // pred_check
        %p228 = pneg %p227
      $region38: #{tpu_custom_call.1} parent=5 // pred_check_branch
        %230 = sbr.rel (%p228) target = $region40
      $region39: #{tpu_custom_call.1} parent=5 // pred_region
        // Predicated region
        $region41: #{tpu_custom_call.1} parent=39 // pred_check
          %p231 = pneg %p36
        $region42: #{tpu_custom_call.1} parent=39 // pred_check_branch
          %233 = sbr.rel (%p231) target = $region44
        $region43: #{tpu_custom_call.1} parent=39 // pred_region
          %s234 = smul.u32 16, %s16
          %p235 = scmp.lt.s32.totalorder %s234, 31
          %s236 = scalar_select %p235, %s234, 31
          %s237 = smul.addr %s236, 4
          %s238 = scalar_lea.vmem %s0, %s237
          %s239 = smul.u32 16, %s16
        $region44: #{tpu_custom_call.1} parent=39 // pred_fallthru
          _
      $region40: #{tpu_custom_call.1} parent=5 // pred_fallthru
        _
      %p240 = scmp.le.s32.totalorder 1, %s16
      %p241 = scmp.lt.s32.totalorder %s16, 3
      %p242 = pnand %p240, %p241
      %p243 = pneg %p242
      // Predicated region
      $region45: #{tpu_custom_call.1} parent=5 // pred_check
        _
      $region46: #{tpu_custom_call.1} parent=5 // pred_check_branch
        %245 = sbr.rel (%p242) target = $region48
      $region47: #{tpu_custom_call.1} parent=5 // pred_region
        %s246 = ssub.s32 %s16, 1
        %s247 = smul.u32 16, %s21
        %p248 = scmp.lt.s32.totalorder %s247, 31
        %s249 = scalar_select %p248, %s247, 31
        %s250 = smul.addr %s249, 4
        %s251 = scalar_lea.vmem %s0, %s250
        %p252 = pneg %p42
        %p253 = pneg %p39
        %p254 = pneg %p63
        %p255 = pneg %p60
        %p256 = pneg %p84
        %p257 = pneg %p81
        %p258 = pneg %p105
        %p259 = pneg %p102
        %p260 = pneg %p126
        %p261 = pneg %p123
        %p262 = pneg %p147
        %p263 = pneg %p144
        %p264 = pneg %p168
        %p265 = pneg %p165
        %p266 = pneg %p194
        %p267 = pneg %p191
        %s268 = sand.u32 %s181, 1
        %s269 = scalar_lea.sflag [#allocation3], %s268
        %s270 = sand.u32 %s181, 1
        %s271 = smul.addr %s270, 128
        %s272 = scalar_lea.vmem [#allocation2], %s271
        %s273 = smul.u32 16, %s21
        %p274 = scmp.lt.s32.totalorder %s273, 31
        %s275 = scalar_select %p274, %s273, 31
        %s276 = smul.addr %s275, 4
        %s277 = scalar_lea.vmem %s0, %s276
        %s278 = smul.u32 16, %s21
        %s279 = smul.u32 16, %s21
        %v281 = vld [vmem:[%s277] sm:$0xf]
        %v282 = vld [vmem:[%s277 + $0x4] sm:$0xf]
        %v283 = vld [vmem:[%s277 + $0x8] sm:$0xf]
        %v284 = vld [vmem:[%s277 + $0xc] sm:$0xf]
        %v285 = vld [vmem:[%s277 + $0x10] sm:$0xf]
        %v286 = vld [vmem:[%s277 + $0x14] sm:$0xf]
        %v287 = vld [vmem:[%s277 + $0x18] sm:$0xf]
        %v288 = vld [vmem:[%s277 + $0x1c] sm:$0xf]
        %v289 = vld [vmem:[%s277 + $0x20] sm:$0xf]
        %v290 = vld [vmem:[%s277 + $0x24] sm:$0xf]
        %v291 = vld [vmem:[%s277 + $0x28] sm:$0xf]
        %v292 = vld [vmem:[%s277 + $0x2c] sm:$0xf]
        %v293 = vld [vmem:[%s277 + $0x30] sm:$0xf]
        %v294 = vld [vmem:[%s277 + $0x34] sm:$0xf]
        %v295 = vld [vmem:[%s277 + $0x38] sm:$0xf]
        %v296 = vld [vmem:[%s277 + $0x3c] sm:$0xf]
        %v297 = vld [vmem:[%s1] sm:$0xf]
        %v298 = vld [vmem:[%s1 + $0x4] sm:$0xf]
        %v299 = vld [vmem:[%s2] sm:$0x1]
        %v301 = vlaneseq
        %v302 = vshrl.u32 %v301, 7
        %v303 = vsub.s32 0, %v302
        %v304 = vrot.slane %v299, %v303
        %v322 = vunpack.c.l.b16 %v281
        %v323 = vunpack.c.l.b16 %v282
        %v324 = vunpack.c.l.b16 %v283
        %v325 = vunpack.c.l.b16 %v284
        %v326 = vunpack.c.l.b16 %v285
        %v327 = vunpack.c.l.b16 %v286
        %v328 = vunpack.c.l.b16 %v287
        %v329 = vunpack.c.l.b16 %v288
        %v330 = vunpack.c.l.b16 %v289
        %v331 = vunpack.c.l.b16 %v290
        %v332 = vunpack.c.l.b16 %v291
        %v333 = vunpack.c.l.b16 %v292
        %v334 = vunpack.c.l.b16 %v293
        %v335 = vunpack.c.l.b16 %v294
        %v336 = vunpack.c.l.b16 %v295
        %v337 = vunpack.c.l.b16 %v296
        %v338 = vpack.c.b16 %v323, %v322
        %v339 = vpack.c.b16 %v325, %v324
        %v340 = vpack.c.b16 %v327, %v326
        %v341 = vpack.c.b16 %v329, %v328
        %v342 = vpack.c.b16 %v331, %v330
        %v343 = vpack.c.b16 %v333, %v332
        %v344 = vpack.c.b16 %v335, %v334
        %v345 = vpack.c.b16 %v337, %v336
        %v348 = vunpack.c.l.b16 %v297
        %v349 = vunpack.c.l.b16 %v298
        %v350 = vpack.c.b16 %v349, %v348
        %vm352 = vcmask 130048
        %v354 = vsel %vm352, %v338, 0
        %v357 = vsel %vm352, %v339, 0
        %v360 = vsel %vm352, %v340, 0
        %v363 = vsel %vm352, %v341, 0
        %v366 = vsel %vm352, %v342, 0
        %v369 = vsel %vm352, %v343, 0
        %v372 = vsel %vm352, %v344, 0
        %v375 = vsel %vm352, %v345, 0
        %377 = vmatprep.subr.bf16.mxu0 0
        %378 = vmatpush1.bf16.msra.mxu0 0
        %379 = vmatprep.subr.bf16.mxu0 0
        %380 = vmatpush1.bf16.msra.mxu0 0
        %381 = vmatprep.subr.bf16.mxu0 0
        %382 = vmatpush1.bf16.msra.mxu0 0
        %383 = vmatprep.subr.bf16.mxu0 0
        %384 = vmatpush1.bf16.msra.mxu0 0
        %385 = vmatprep.subr.bf16.mxu0 0
        %386 = vmatpush1.bf16.msra.mxu0 0
        %387 = vmatprep.subr.bf16.mxu0 0
        %388 = vmatpush1.bf16.msra.mxu0 0
        %389 = vmatprep.subr.bf16.mxu0 0
        %390 = vmatpush1.bf16.msra.mxu0 0
        %391 = vmatprep.subr.bf16.mxu0 0
        %392 = vmatpush1.bf16.msra.mxu0 %v350
        %393 = vmatprep.subr.bf16.mxu0 0
        %394 = vmatpush2.bf16.msra.mxu0 0
        %395 = vmatprep.subr.bf16.mxu0 0
        %396 = vmatpush2.bf16.msra.mxu0 0
        %397 = vmatprep.subr.bf16.mxu0 0
        %398 = vmatpush2.bf16.msra.mxu0 0
        %399 = vmatprep.subr.bf16.mxu0 0
        %400 = vmatpush2.bf16.msra.mxu0 0
        %401 = vmatprep.subr.bf16.mxu0 0
        %402 = vmatpush2.bf16.msra.mxu0 0
        %403 = vmatprep.subr.bf16.mxu0 0
        %404 = vmatpush2.bf16.msra.mxu0 0
        %405 = vmatprep.subr.bf16.mxu0 0
        %406 = vmatpush2.bf16.msra.mxu0 0
        %407 = vmatprep.subr.bf16.mxu0 0
        %408 = vmatpush2.bf16.msra.mxu0 0
        %409 = vmatprep.mubr.bf16.mxu0 0
        %410 = vmatmul.mubr.bf16.gmra.mxu0 %v354
        %v411 = vpop.f32.mrf.mxu0
        %v412 = vadd.f32 %v304, %v411
        %v413 = vpop.f32.mrf.mxu0
        %v414 = vpop.f32.mrf.mxu0
        %v415 = vadd.f32 %v304, %v414
        %v416 = vpop.f32.mrf.mxu0
        %417 = vmatprep.mubr.bf16.mxu0 0
        %418 = vmatmul.mubr.bf16.gmra.mxu0 %v357
        %v419 = vpop.f32.mrf.mxu0
        %v420 = vadd.f32 %v304, %v419
        %v421 = vpop.f32.mrf.mxu0
        %v422 = vpop.f32.mrf.mxu0
        %v423 = vadd.f32 %v304, %v422
        %v424 = vpop.f32.mrf.mxu0
        %425 = vmatprep.mubr.bf16.mxu0 0
        %426 = vmatmul.mubr.bf16.gmra.mxu0 %v360
        %v427 = vpop.f32.mrf.mxu0
        %v428 = vadd.f32 %v304, %v427
        %v429 = vpop.f32.mrf.mxu0
        %v430 = vpop.f32.mrf.mxu0
        %v431 = vadd.f32 %v304, %v430
        %v432 = vpop.f32.mrf.mxu0
        %433 = vmatprep.mubr.bf16.mxu0 0
        %434 = vmatmul.mubr.bf16.gmra.mxu0 %v363
        %v435 = vpop.f32.mrf.mxu0
        %v436 = vadd.f32 %v304, %v435
        %v437 = vpop.f32.mrf.mxu0
        %v438 = vpop.f32.mrf.mxu0
        %v439 = vadd.f32 %v304, %v438
        %v440 = vpop.f32.mrf.mxu0
        %441 = vmatprep.mubr.bf16.mxu0 0
        %442 = vmatmul.mubr.bf16.gmra.mxu0 %v366
        %v443 = vpop.f32.mrf.mxu0
        %v444 = vadd.f32 %v304, %v443
        %v445 = vpop.f32.mrf.mxu0
        %v446 = vpop.f32.mrf.mxu0
        %v447 = vadd.f32 %v304, %v446
        %v448 = vpop.f32.mrf.mxu0
        %449 = vmatprep.mubr.bf16.mxu0 0
        %450 = vmatmul.mubr.bf16.gmra.mxu0 %v369
        %v451 = vpop.f32.mrf.mxu0
        %v452 = vadd.f32 %v304, %v451
        %v453 = vpop.f32.mrf.mxu0
        %v454 = vpop.f32.mrf.mxu0
        %v455 = vadd.f32 %v304, %v454
        %v456 = vpop.f32.mrf.mxu0
        %457 = vmatprep.mubr.bf16.mxu0 0
        %458 = vmatmul.mubr.bf16.gmra.mxu0 %v372
        %v459 = vpop.f32.mrf.mxu0
        %v460 = vadd.f32 %v304, %v459
        %v461 = vpop.f32.mrf.mxu0
        %v462 = vpop.f32.mrf.mxu0
        %v463 = vadd.f32 %v304, %v462
        %v464 = vpop.f32.mrf.mxu0
        %465 = vmatprep.mubr.bf16.mxu0 0
        %466 = vmatmul.mubr.bf16.gmra.mxu0 %v375
        %v467 = vpop.f32.mrf.mxu0
        %v468 = vadd.f32 %v304, %v467
        %v469 = vpop.f32.mrf.mxu0
        %v470 = vpop.f32.mrf.mxu0
        %v471 = vadd.f32 %v304, %v470
        %v472 = vpop.f32.mrf.mxu0
        %473 = vdwg.mxu0
        %v474 = vmax.f32 %v412, 0.0
        %v475 = vmax.f32 %v415, 0.0
        %v476 = vmax.f32 %v420, 0.0
        %v477 = vmax.f32 %v423, 0.0
        %v478 = vmax.f32 %v428, 0.0
        %v479 = vmax.f32 %v431, 0.0
        %v480 = vmax.f32 %v436, 0.0
        %v481 = vmax.f32 %v439, 0.0
        %v482 = vmax.f32 %v444, 0.0
        %v483 = vmax.f32 %v447, 0.0
        %v484 = vmax.f32 %v452, 0.0
        %v485 = vmax.f32 %v455, 0.0
        %v486 = vmax.f32 %v460, 0.0
        %v487 = vmax.f32 %v463, 0.0
        %v488 = vmax.f32 %v468, 0.0
        %v489 = vmax.f32 %v471, 0.0
        %v490 = vpack.c.bf16 %v475, %v474
        %v491 = vpack.c.bf16 %v477, %v476
        %v492 = vpack.c.bf16 %v479, %v478
        %v493 = vpack.c.bf16 %v481, %v480
        %v494 = vpack.c.bf16 %v483, %v482
        %v495 = vpack.c.bf16 %v485, %v484
        %v496 = vpack.c.bf16 %v487, %v486
        %v497 = vpack.c.bf16 %v489, %v488
        %v498 = vld [vmem:[%s3] sm:$0xf]
        %v499 = vld [vmem:[%s3 + $0x4] sm:$0xf]
        %v500 = vld [vmem:[%s3 + $0x8] sm:$0xf]
        %v501 = vld [vmem:[%s3 + $0xc] sm:$0xf]
        %v502 = vld [vmem:[%s3 + $0x10] sm:$0xf]
        %v503 = vld [vmem:[%s3 + $0x14] sm:$0xf]
        %v504 = vld [vmem:[%s3 + $0x18] sm:$0xf]
        %v505 = vld [vmem:[%s3 + $0x1c] sm:$0xf]
        %v506 = vld [vmem:[%s3 + $0x20] sm:$0xf]
        %v507 = vld [vmem:[%s3 + $0x24] sm:$0xf]
        %v508 = vld [vmem:[%s3 + $0x28] sm:$0xf]
        %v509 = vld [vmem:[%s3 + $0x2c] sm:$0xf]
        %v510 = vld [vmem:[%s3 + $0x30] sm:$0xf]
        %v511 = vld [vmem:[%s3 + $0x34] sm:$0xf]
        %v512 = vld [vmem:[%s3 + $0x38] sm:$0xf]
        %v513 = vld [vmem:[%s3 + $0x3c] sm:$0xf]
        %v514 = vld [vmem:[%s4] sm:$0x1]
        %v516 = vlaneseq
        %v517 = vshrl.u32 %v516, 7
        %v518 = vsub.s32 0, %v517
        %v519 = vrot.slane %v514, %v518
        %v537 = vunpack.c.l.b16 %v498
        %v538 = vunpack.c.l.b16 %v499
        %v539 = vunpack.c.l.b16 %v500
        %v540 = vunpack.c.l.b16 %v501
        %v541 = vunpack.c.l.b16 %v502
        %v542 = vunpack.c.l.b16 %v503
        %v543 = vunpack.c.l.b16 %v504
        %v544 = vunpack.c.l.b16 %v505
        %v545 = vunpack.c.l.b16 %v506
        %v546 = vunpack.c.l.b16 %v507
        %v547 = vunpack.c.l.b16 %v508
        %v548 = vunpack.c.l.b16 %v509
        %v549 = vunpack.c.l.b16 %v510
        %v550 = vunpack.c.l.b16 %v511
        %v551 = vunpack.c.l.b16 %v512
        %v552 = vunpack.c.l.b16 %v513
        %v553 = vpack.c.b16 %v538, %v537
        %v554 = vpack.c.b16 %v540, %v539
        %v555 = vpack.c.b16 %v542, %v541
        %v556 = vpack.c.b16 %v544, %v543
        %v557 = vpack.c.b16 %v546, %v545
        %v558 = vpack.c.b16 %v548, %v547
        %v559 = vpack.c.b16 %v550, %v549
        %v560 = vpack.c.b16 %v552, %v551
        %569 = vmatprep.subr.bf16.mxu0 0
        %570 = vmatpush1.bf16.msra.mxu0 %v560
        %571 = vmatprep.subr.bf16.mxu0 0
        %572 = vmatpush1.bf16.msra.mxu0 %v559
        %573 = vmatprep.subr.bf16.mxu0 0
        %574 = vmatpush1.bf16.msra.mxu0 %v558
        %575 = vmatprep.subr.bf16.mxu0 0
        %576 = vmatpush1.bf16.msra.mxu0 %v557
        %577 = vmatprep.subr.bf16.mxu0 0
        %578 = vmatpush1.bf16.msra.mxu0 %v556
        %579 = vmatprep.subr.bf16.mxu0 0
        %580 = vmatpush1.bf16.msra.mxu0 %v555
        %581 = vmatprep.subr.bf16.mxu0 0
        %582 = vmatpush1.bf16.msra.mxu0 %v554
        %583 = vmatprep.subr.bf16.mxu0 0
        %584 = vmatpush1.bf16.msra.mxu0 %v553
        %585 = vmatprep.subr.bf16.mxu0 0
        %586 = vmatpush2.bf16.msra.mxu0 0
        %587 = vmatprep.subr.bf16.mxu0 0
        %588 = vmatpush2.bf16.msra.mxu0 0
        %589 = vmatprep.subr.bf16.mxu0 0
        %590 = vmatpush2.bf16.msra.mxu0 0
        %591 = vmatprep.subr.bf16.mxu0 0
        %592 = vmatpush2.bf16.msra.mxu0 0
        %593 = vmatprep.subr.bf16.mxu0 0
        %594 = vmatpush2.bf16.msra.mxu0 0
        %595 = vmatprep.subr.bf16.mxu0 0
        %596 = vmatpush2.bf16.msra.mxu0 0
        %597 = vmatprep.subr.bf16.mxu0 0
        %598 = vmatpush2.bf16.msra.mxu0 0
        %599 = vmatprep.subr.bf16.mxu0 0
        %600 = vmatpush2.bf16.msra.mxu0 0
        %601 = vmatprep.mubr.bf16.mxu0 0
        %602 = vmatmul.mubr.bf16.gmra.mxu0 %v490
        %v603 = vpop.f32.mrf.mxu0
        %v604 = vadd.f32 %v519, %v603
        %v605 = vpop.f32.mrf.mxu0
        %v606 = vpop.f32.mrf.mxu0
        %v607 = vadd.f32 %v519, %v606
        %v608 = vpop.f32.mrf.mxu0
        %609 = vmatprep.mubr.bf16.mxu0 0
        %610 = vmatmul.mubr.bf16.gmra.mxu0 %v491
        %v611 = vpop.f32.mrf.mxu0
        %v612 = vadd.f32 %v519, %v611
        %v613 = vpop.f32.mrf.mxu0
        %v614 = vpop.f32.mrf.mxu0
        %v615 = vadd.f32 %v519, %v614
        %v616 = vpop.f32.mrf.mxu0
        %617 = vmatprep.mubr.bf16.mxu0 0
        %618 = vmatmul.mubr.bf16.gmra.mxu0 %v492
        %v619 = vpop.f32.mrf.mxu0
        %v620 = vadd.f32 %v519, %v619
        %v621 = vpop.f32.mrf.mxu0
        %v622 = vpop.f32.mrf.mxu0
        %v623 = vadd.f32 %v519, %v622
        %v624 = vpop.f32.mrf.mxu0
        %625 = vmatprep.mubr.bf16.mxu0 0
        %626 = vmatmul.mubr.bf16.gmra.mxu0 %v493
        %v627 = vpop.f32.mrf.mxu0
        %v628 = vadd.f32 %v519, %v627
        %v629 = vpop.f32.mrf.mxu0
        %v630 = vpop.f32.mrf.mxu0
        %v631 = vadd.f32 %v519, %v630
        %v632 = vpop.f32.mrf.mxu0
        %633 = vmatprep.mubr.bf16.mxu0 0
        %634 = vmatmul.mubr.bf16.gmra.mxu0 %v494
        %v635 = vpop.f32.mrf.mxu0
        %v636 = vadd.f32 %v519, %v635
        %v637 = vpop.f32.mrf.mxu0
        %v638 = vpop.f32.mrf.mxu0
        %v639 = vadd.f32 %v519, %v638
        %v640 = vpop.f32.mrf.mxu0
        %641 = vmatprep.mubr.bf16.mxu0 0
        %642 = vmatmul.mubr.bf16.gmra.mxu0 %v495
        %v643 = vpop.f32.mrf.mxu0
        %v644 = vadd.f32 %v519, %v643
        %v645 = vpop.f32.mrf.mxu0
        %v646 = vpop.f32.mrf.mxu0
        %v647 = vadd.f32 %v519, %v646
        %v648 = vpop.f32.mrf.mxu0
        %649 = vmatprep.mubr.bf16.mxu0 0
        %650 = vmatmul.mubr.bf16.gmra.mxu0 %v496
        %v651 = vpop.f32.mrf.mxu0
        %v652 = vadd.f32 %v519, %v651
        %v653 = vpop.f32.mrf.mxu0
        %v654 = vpop.f32.mrf.mxu0
        %v655 = vadd.f32 %v519, %v654
        %v656 = vpop.f32.mrf.mxu0
        %657 = vmatprep.mubr.bf16.mxu0 0
        %658 = vmatmul.mubr.bf16.gmra.mxu0 %v497
        %v659 = vpop.f32.mrf.mxu0
        %v660 = vadd.f32 %v519, %v659
        %v661 = vpop.f32.mrf.mxu0
        %v662 = vpop.f32.mrf.mxu0
        %v663 = vadd.f32 %v519, %v662
        %v664 = vpop.f32.mrf.mxu0
        %665 = vdwg.mxu0
        %v666 = vmax.f32 %v604, 0.0
        %v667 = vmax.f32 %v607, 0.0
        %v668 = vmax.f32 %v612, 0.0
        %v669 = vmax.f32 %v615, 0.0
        %v670 = vmax.f32 %v620, 0.0
        %v671 = vmax.f32 %v623, 0.0
        %v672 = vmax.f32 %v628, 0.0
        %v673 = vmax.f32 %v631, 0.0
        %v674 = vmax.f32 %v636, 0.0
        %v675 = vmax.f32 %v639, 0.0
        %v676 = vmax.f32 %v644, 0.0
        %v677 = vmax.f32 %v647, 0.0
        %v678 = vmax.f32 %v652, 0.0
        %v679 = vmax.f32 %v655, 0.0
        %v680 = vmax.f32 %v660, 0.0
        %v681 = vmax.f32 %v663, 0.0
        %v682 = vpack.c.bf16 %v667, %v666
        %v683 = vpack.c.bf16 %v669, %v668
        %v684 = vpack.c.bf16 %v671, %v670
        %v685 = vpack.c.bf16 %v673, %v672
        %v686 = vpack.c.bf16 %v675, %v674
        %v687 = vpack.c.bf16 %v677, %v676
        %v688 = vpack.c.bf16 %v679, %v678
        %v689 = vpack.c.bf16 %v681, %v680
        %v690 = vld [vmem:[%s5] sm:$0xf]
        %v691 = vld [vmem:[%s5 + $0x4] sm:$0xf]
        %v692 = vld [vmem:[%s5 + $0x8] sm:$0xf]
        %v693 = vld [vmem:[%s5 + $0xc] sm:$0xf]
        %v694 = vld [vmem:[%s5 + $0x10] sm:$0xf]
        %v695 = vld [vmem:[%s5 + $0x14] sm:$0xf]
        %v696 = vld [vmem:[%s5 + $0x18] sm:$0xf]
        %v697 = vld [vmem:[%s5 + $0x1c] sm:$0xf]
        %v698 = vld [vmem:[%s5 + $0x20] sm:$0xf]
        %v699 = vld [vmem:[%s5 + $0x24] sm:$0xf]
        %v700 = vld [vmem:[%s5 + $0x28] sm:$0xf]
        %v701 = vld [vmem:[%s5 + $0x2c] sm:$0xf]
        %v702 = vld [vmem:[%s5 + $0x30] sm:$0xf]
        %v703 = vld [vmem:[%s5 + $0x34] sm:$0xf]
        %v704 = vld [vmem:[%s5 + $0x38] sm:$0xf]
        %v705 = vld [vmem:[%s5 + $0x3c] sm:$0xf]
        %v706 = vld [vmem:[%s6] sm:$0x1]
        %v708 = vlaneseq
        %v709 = vshrl.u32 %v708, 7
        %v710 = vsub.s32 0, %v709
        %v711 = vrot.slane %v706, %v710
        %v729 = vunpack.c.l.b16 %v690
        %v730 = vunpack.c.l.b16 %v691
        %v731 = vunpack.c.l.b16 %v692
        %v732 = vunpack.c.l.b16 %v693
        %v733 = vunpack.c.l.b16 %v694
        %v734 = vunpack.c.l.b16 %v695
        %v735 = vunpack.c.l.b16 %v696
        %v736 = vunpack.c.l.b16 %v697
        %v737 = vunpack.c.l.b16 %v698
        %v738 = vunpack.c.l.b16 %v699
        %v739 = vunpack.c.l.b16 %v700
        %v740 = vunpack.c.l.b16 %v701
        %v741 = vunpack.c.l.b16 %v702
        %v742 = vunpack.c.l.b16 %v703
        %v743 = vunpack.c.l.b16 %v704
        %v744 = vunpack.c.l.b16 %v705
        %v745 = vpack.c.b16 %v730, %v729
        %v746 = vpack.c.b16 %v732, %v731
        %v747 = vpack.c.b16 %v734, %v733
        %v748 = vpack.c.b16 %v736, %v735
        %v749 = vpack.c.b16 %v738, %v737
        %v750 = vpack.c.b16 %v740, %v739
        %v751 = vpack.c.b16 %v742, %v741
        %v752 = vpack.c.b16 %v744, %v743
        %761 = vmatprep.subr.bf16.mxu0 0
        %762 = vmatpush1.bf16.msra.mxu0 %v752
        %763 = vmatprep.subr.bf16.mxu0 0
        %764 = vmatpush1.bf16.msra.mxu0 %v751
        %765 = vmatprep.subr.bf16.mxu0 0
        %766 = vmatpush1.bf16.msra.mxu0 %v750
        %767 = vmatprep.subr.bf16.mxu0 0
        %768 = vmatpush1.bf16.msra.mxu0 %v749
        %769 = vmatprep.subr.bf16.mxu0 0
        %770 = vmatpush1.bf16.msra.mxu0 %v748
        %771 = vmatprep.subr.bf16.mxu0 0
        %772 = vmatpush1.bf16.msra.mxu0 %v747
        %773 = vmatprep.subr.bf16.mxu0 0
        %774 = vmatpush1.bf16.msra.mxu0 %v746
        %775 = vmatprep.subr.bf16.mxu0 0
        %776 = vmatpush1.bf16.msra.mxu0 %v745
        %777 = vmatprep.subr.bf16.mxu0 0
        %778 = vmatpush2.bf16.msra.mxu0 0
        %779 = vmatprep.subr.bf16.mxu0 0
        %780 = vmatpush2.bf16.msra.mxu0 0
        %781 = vmatprep.subr.bf16.mxu0 0
        %782 = vmatpush2.bf16.msra.mxu0 0
        %783 = vmatprep.subr.bf16.mxu0 0
        %784 = vmatpush2.bf16.msra.mxu0 0
        %785 = vmatprep.subr.bf16.mxu0 0
        %786 = vmatpush2.bf16.msra.mxu0 0
        %787 = vmatprep.subr.bf16.mxu0 0
        %788 = vmatpush2.bf16.msra.mxu0 0
        %789 = vmatprep.subr.bf16.mxu0 0
        %790 = vmatpush2.bf16.msra.mxu0 0
        %791 = vmatprep.subr.bf16.mxu0 0
        %792 = vmatpush2.bf16.msra.mxu0 0
        %793 = vmatprep.mubr.bf16.mxu0 0
        %794 = vmatmul.mubr.bf16.gmra.mxu0 %v682
        %v795 = vpop.f32.mrf.mxu0
        %v796 = vadd.f32 %v711, %v795
        %v797 = vpop.f32.mrf.mxu0
        %v798 = vpop.f32.mrf.mxu0
        %v799 = vadd.f32 %v711, %v798
        %v800 = vpop.f32.mrf.mxu0
        %801 = vmatprep.mubr.bf16.mxu0 0
        %802 = vmatmul.mubr.bf16.gmra.mxu0 %v683
        %v803 = vpop.f32.mrf.mxu0
        %v804 = vadd.f32 %v711, %v803
        %v805 = vpop.f32.mrf.mxu0
        %v806 = vpop.f32.mrf.mxu0
        %v807 = vadd.f32 %v711, %v806
        %v808 = vpop.f32.mrf.mxu0
        %809 = vmatprep.mubr.bf16.mxu0 0
        %810 = vmatmul.mubr.bf16.gmra.mxu0 %v684
        %v811 = vpop.f32.mrf.mxu0
        %v812 = vadd.f32 %v711, %v811
        %v813 = vpop.f32.mrf.mxu0
        %v814 = vpop.f32.mrf.mxu0
        %v815 = vadd.f32 %v711, %v814
        %v816 = vpop.f32.mrf.mxu0
        %817 = vmatprep.mubr.bf16.mxu0 0
        %818 = vmatmul.mubr.bf16.gmra.mxu0 %v685
        %v819 = vpop.f32.mrf.mxu0
        %v820 = vadd.f32 %v711, %v819
        %v821 = vpop.f32.mrf.mxu0
        %v822 = vpop.f32.mrf.mxu0
        %v823 = vadd.f32 %v711, %v822
        %v824 = vpop.f32.mrf.mxu0
        %825 = vmatprep.mubr.bf16.mxu0 0
        %826 = vmatmul.mubr.bf16.gmra.mxu0 %v686
        %v827 = vpop.f32.mrf.mxu0
        %v828 = vadd.f32 %v711, %v827
        %v829 = vpop.f32.mrf.mxu0
        %v830 = vpop.f32.mrf.mxu0
        %v831 = vadd.f32 %v711, %v830
        %v832 = vpop.f32.mrf.mxu0
        %833 = vmatprep.mubr.bf16.mxu0 0
        %834 = vmatmul.mubr.bf16.gmra.mxu0 %v687
        %v835 = vpop.f32.mrf.mxu0
        %v836 = vadd.f32 %v711, %v835
        %v837 = vpop.f32.mrf.mxu0
        %v838 = vpop.f32.mrf.mxu0
        %v839 = vadd.f32 %v711, %v838
        %v840 = vpop.f32.mrf.mxu0
        %841 = vmatprep.mubr.bf16.mxu0 0
        %842 = vmatmul.mubr.bf16.gmra.mxu0 %v688
        %v843 = vpop.f32.mrf.mxu0
        %v844 = vadd.f32 %v711, %v843
        %v845 = vpop.f32.mrf.mxu0
        %v846 = vpop.f32.mrf.mxu0
        %v847 = vadd.f32 %v711, %v846
        %v848 = vpop.f32.mrf.mxu0
        %849 = vmatprep.mubr.bf16.mxu0 0
        %850 = vmatmul.mubr.bf16.gmra.mxu0 %v689
        %v851 = vpop.f32.mrf.mxu0
        %v852 = vadd.f32 %v711, %v851
        %v853 = vpop.f32.mrf.mxu0
        %v854 = vpop.f32.mrf.mxu0
        %v855 = vadd.f32 %v711, %v854
        %v856 = vpop.f32.mrf.mxu0
        %857 = vdwg.mxu0
        %858 = vst [vmem:[%s272] sm:$0xff] %v796
        %859 = vst [vmem:[%s272 + $0x8] sm:$0xff] %v799
        %860 = vst [vmem:[%s272 + $0x10] sm:$0xff] %v804
        %861 = vst [vmem:[%s272 + $0x18] sm:$0xff] %v807
        %862 = vst [vmem:[%s272 + $0x20] sm:$0xff] %v812
        %863 = vst [vmem:[%s272 + $0x28] sm:$0xff] %v815
        %864 = vst [vmem:[%s272 + $0x30] sm:$0xff] %v820
        %865 = vst [vmem:[%s272 + $0x38] sm:$0xff] %v823
        %866 = vst [vmem:[%s272 + $0x40] sm:$0xff] %v828
        %867 = vst [vmem:[%s272 + $0x48] sm:$0xff] %v831
        %868 = vst [vmem:[%s272 + $0x50] sm:$0xff] %v836
        %869 = vst [vmem:[%s272 + $0x58] sm:$0xff] %v839
        %870 = vst [vmem:[%s272 + $0x60] sm:$0xff] %v844
        %871 = vst [vmem:[%s272 + $0x68] sm:$0xff] %v847
        %872 = vst [vmem:[%s272 + $0x70] sm:$0xff] %v852
        %873 = vst [vmem:[%s272 + $0x78] sm:$0xff] %v855
        %s874 = sand.u32 %s181, 1
        %s875 = scalar_lea.sflag [#allocation3], %s874
        %s876 = sand.u32 %s181, 1
        %s877 = smul.addr %s876, 128
        %s878 = scalar_lea.vmem [#allocation2], %s877
        // Predicated region
        $region49: #{tpu_custom_call.1} parent=47 // pred_check
          %p879 = pneg %p191
        $region50: #{tpu_custom_call.1} parent=47 // pred_check_branch
          %881 = sbr.rel (%p879) target = $region52
        $region51: #{tpu_custom_call.1} parent=47 // pred_region
          %s882 = smul.u32 16, %s21
          %s884 = ssub.s32 2048, 2048
          %885 = vsyncadd %s875, %s884
          %s886 = smul.addr %s882, 128
          %s887 = scalar_lea.hbm %s7, %s886
          %s888 = sshll.u32 %s878, 4
          %s889 = int_to_ptr.vmem [resolvable:$true] %s888
          %894 = dma.vmem_to_hbm [thread:$0]  %s889, 2048, %s887, %s875, 128, 128, 8
        $region52: #{tpu_custom_call.1} parent=47 // pred_fallthru
          _
      $region48: #{tpu_custom_call.1} parent=5 // pred_fallthru
        _
      %p895 = scmp.le.s32.totalorder 2, %s16
      // Predicated region
      $region53: #{tpu_custom_call.1} parent=5 // pred_check
        %p896 = pneg %p895
      $region54: #{tpu_custom_call.1} parent=5 // pred_check_branch
        %898 = sbr.rel (%p896) target = $region56
      $region55: #{tpu_custom_call.1} parent=5 // pred_region
        %s899 = ssub.s32 %s16, 2
        // Predicated region
        $region57: #{tpu_custom_call.1} parent=55 // pred_check
          %p900 = pneg %p197
        $region58: #{tpu_custom_call.1} parent=55 // pred_check_branch
          %902 = sbr.rel (%p900) target = $region60
        $region59: #{tpu_custom_call.1} parent=55 // pred_region
          %s903 = sand.u32 %s182, 1
          %s904 = scalar_lea.sflag [#allocation3], %s903
          %s905 = sand.u32 %s182, 1
          %s906 = smul.addr %s905, 128
          %s907 = scalar_lea.vmem [#allocation2], %s906
          %908 = dma.done %s904, 2048
        $region60: #{tpu_custom_call.1} parent=55 // pred_fallthru
          _
      $region56: #{tpu_custom_call.1} parent=5 // pred_fallthru
        _
    $region6: #{tpu_custom_call.1} parent=1 // loop_footer
      %s20 = sadd.s32 1, %s16
    $region7: #{tpu_custom_call.1} parent=1 // loop_footer_branch
      %15 = sbr.rel target = $region3
    $region8: #{tpu_custom_call.1} parent=1 // loop_exit
      _
    %909 = vsyncpa [#allocation3], 1
    %s910 = scalar_lea.sflag [#allocation3], 1
    %911 = vsyncpa %s910, 1

</llo_original>
